<compile_context>
chip_gen: v5e
topology: v5e:2x2
jax: 0.10.0
libtpu: 0.0.40
codegen_flags: <defaults>
</compile_context>

<pallas_src>
import math
from functools import partial

import jax
import jax.numpy as jnp
from jax.experimental import pallas as pl
from jax.experimental.pallas import tpu as pltpu


# ---------------------------------------------------------------------------
# Kernel
# ---------------------------------------------------------------------------
def _pos_encoding_linear_kernel(x_ref, w_ref, b_ref, o_ref, *,
                                dim_in, split_store, precision):
    # x_ref: (tm, dim_in)            input rows (VMEM tile)
    # w_ref: (dim_in, dim_out)       full weight, resident (constant index map)
    # b_ref: (1, dim_out)            bias
    # o_ref: (tm, dim_in + dim_out)  output tile = [x | x @ w + b]
    x = x_ref[...]
    y = jnp.dot(x, w_ref[...],
                preferred_element_type=jnp.float32,
                precision=precision) + b_ref[...]
    if split_store:
        # dim_in and dim_out are both multiples of 128: the two slice stores
        # land on lane boundaries and lower to unmasked vst already.
        o_ref[:, :dim_in] = x.astype(o_ref.dtype)
        o_ref[:, dim_in:] = y.astype(o_ref.dtype)
    else:
        # Misaligned halves: merge the full row in registers (XLU slot,
        # otherwise idle here) and issue ONE unmasked full-width store per
        # vreg row instead of two masked vst.msk stores.
        row = jnp.concatenate(
            [x.astype(o_ref.dtype), y.astype(o_ref.dtype)], axis=-1)
        o_ref[...] = row


# ---------------------------------------------------------------------------
# Tile selection (generation-aware, VMEM-budgeted)
# ---------------------------------------------------------------------------
_VMEM_TILE_BUDGET = 48 * 1024 * 1024   # fits v7x's 64 MiB physical VMEM w/ headroom


def _min_grid_steps() -> int:
    """v7x has 2 TensorCores -> want >= 8 parallel steps so both get a share;
    single-TC v5e/v6e only need a few steps to hide the DMA pipeline."""
    try:
        kind = jax.devices()[0].device_kind.lower()
    except Exception:
        return 4
    if "v7" in kind or "7x" in kind:
        return 8
    return 4


def _choose_row_tile(M, dim_in, out_dim, x_itemsize, out_itemsize,
                     w_bytes, b_bytes, tm_max):
    """Largest row tile that fits the VMEM budget (mem-bound kernel -> big
    tiles), rounded to the sublane tile, shrunk only to keep the pipeline /
    second TensorCore fed when there is enough work."""
    sub = 16 if min(x_itemsize, out_itemsize) < 4 else 8  # bf16 packs 16 rows/vreg
    # Bytes that scale with tm: double-buffered x tile + double-buffered out tile.
    per_row = 2 * dim_in * x_itemsize + 2 * out_dim * out_itemsize
    budget = max(_VMEM_TILE_BUDGET - w_bytes - b_bytes, per_row * sub)
    tm = min(int(tm_max), int(budget // per_row))
    tm = max(sub, (tm // sub) * sub)               # multiple of the sublane tile
    tm = min(tm, pl.cdiv(M, sub) * sub)            # never bigger than (rounded) M
    min_steps = _min_grid_steps()
    if pl.cdiv(M, tm) < min_steps and M >= min_steps * sub:
        tm = max(sub, (pl.cdiv(M, min_steps) // sub) * sub)
    return tm


# ---------------------------------------------------------------------------
# Wrapper
# ---------------------------------------------------------------------------
def pos_encoding_linear(x, w, b, *, tm=2048,
                        precision=jax.lax.Precision.HIGHEST):
    """x: (..., dim_in), w: (dim_in, dim_out) [= PyTorch weight transposed],
    b: (dim_out,) -> concat([x, x @ w + b], -1): (..., dim_in + dim_out)."""
    dim_in, dim_out = w.shape
    out_dim = dim_in + dim_out
    lead_shape = x.shape[:-1]
    M = int(math.prod(lead_shape)) if lead_shape else 1

    if M == 0:  # empty leading dims: nothing to compute
        return jnp.zeros((*lead_shape, out_dim), dtype=x.dtype)

    x2d = x.reshape(M, dim_in)
    b2d = b.reshape(1, dim_out)

    x_itemsize = x2d.dtype.itemsize
    out_itemsize = x2d.dtype.itemsize              # output keeps the input dtype
    w_bytes = dim_in * dim_out * w.dtype.itemsize  # single-buffered (Buffered(1))
    b_bytes = dim_out * b2d.dtype.itemsize

    tm_eff = _choose_row_tile(M, dim_in, out_dim, x_itemsize, out_itemsize,
                              w_bytes, b_bytes, tm)
    grid = (pl.cdiv(M, tm_eff),)

    # Aligned split stores only when both halves land on 128-lane boundaries.
    split_store = (dim_in % 128 == 0) and (dim_out % 128 == 0)

    # Explicit VMEM budget: double-buffered x/out tiles + single-buffered w/b.
    footprint = (2 * tm_eff * dim_in * x_itemsize
                 + 2 * tm_eff * out_dim * out_itemsize
                 + w_bytes + b_bytes)
    vmem_limit = int(min(56 * 1024 * 1024,
                         max(32 * 1024 * 1024, footprint + (4 << 20))))

    cost = pl.CostEstimate(
        flops=2 * M * dim_in * dim_out,
        transcendentals=0,
        bytes_accessed=(M * dim_in * x_itemsize        # read x
                        + M * out_dim * out_itemsize   # write out
                        + w_bytes + b_bytes),          # read w, b once
    )

    out2d = pl.pallas_call(
        partial(_pos_encoding_linear_kernel, dim_in=dim_in,
                split_store=split_store, precision=precision),
        out_shape=jax.ShapeDtypeStruct((M, out_dim), x.dtype),
        grid_spec=pltpu.PrefetchScalarGridSpec(
            num_scalar_prefetch=0,
            grid=grid,
            in_specs=[
                pl.BlockSpec((tm_eff, dim_in), lambda i: (i, 0)),
                # Constant index maps: w/b are fetched once and stay resident;
                # Buffered(1) drops the pointless second buffer (halves weight
                # VMEM, which matters at production dims on v5e/v7x).
                pl.BlockSpec((dim_in, dim_out), lambda i: (0, 0),
                             pipeline_mode=pl.Buffered(1)),
                pl.BlockSpec((1, dim_out), lambda i: (0, 0),
                             pipeline_mode=pl.Buffered(1)),
            ],
            out_specs=pl.BlockSpec((tm_eff, out_dim), lambda i: (i, 0)),
        ),
        compiler_params=pltpu.CompilerParams(
            dimension_semantics=("parallel",),
            vmem_limit_bytes=vmem_limit),
        cost_estimate=cost,
    )(x2d, w, b2d)

    return out2d.reshape(*lead_shape, out_dim)


def _reference(x, w, b):
    y = jnp.dot(x, w, precision=jax.lax.Precision.HIGHEST) + b
    return jnp.concatenate([x, y], axis=-1)


if __name__ == "__main__":
    # Shapes implied by the module: x (B, S, dim_in), Linear(dim_in, dim_out).
    B, S = 2, 8
    DIM_IN, DIM_OUT = 32, 96  # out_dim = 128 (lane-dense output rows)

    key = jax.random.PRNGKey(0)
    kx, kw, kb = jax.random.split(key, 3)

    x = jax.random.normal(kx, (B, S, DIM_IN), dtype=jnp.float32)

    # Deterministic params mimicking nn.Linear's kaiming-uniform bounds.
    bound = 1.0 / math.sqrt(DIM_IN)
    # PyTorch weight is (dim_out, dim_in); we store its transpose (dim_in, dim_out).
    w = jax.random.uniform(kw, (DIM_IN, DIM_OUT), dtype=jnp.float32,
                           minval=-bound, maxval=bound)
    b = jax.random.uniform(kb, (DIM_OUT,), dtype=jnp.float32,
                           minval=-bound, maxval=bound)

    # 1) Main check (merged single-store path: dim_in % 128 != 0).
    out = jax.block_until_ready(pos_encoding_linear(x, w, b))
    ref = _reference(x, w, b)
    assert out.shape == (B, S, DIM_IN + DIM_OUT), out.shape
    assert jnp.allclose(out, ref, atol=1e-5, rtol=1e-5), "mismatch vs reference"

    # 2) Ragged-M check (cdiv grid + masked tail tile; rows are independent).
    x_odd = jax.random.normal(kx, (3, 5, DIM_IN), dtype=jnp.float32)  # M = 15
    out_odd = jax.block_until_ready(pos_encoding_linear(x_odd, w, b))
    assert out_odd.shape == (3, 5, DIM_IN + DIM_OUT), out_odd.shape
    assert jnp.allclose(out_odd, _reference(x_odd, w, b),
                        atol=1e-5, rtol=1e-5), "tail-tile mismatch"

    # 3) 128-aligned dims (exercises the aligned split-store path).
    DIN2, DOUT2 = 128, 128
    bound2 = 1.0 / math.sqrt(DIN2)
    x2 = jax.random.normal(kx, (4, 16, DIN2), dtype=jnp.float32)
    w2 = jax.random.uniform(kw, (DIN2, DOUT2), dtype=jnp.float32,
                            minval=-bound2, maxval=bound2)
    b2 = jax.random.uniform(kb, (DOUT2,), dtype=jnp.float32,
                            minval=-bound2, maxval=bound2)
    out2 = jax.block_until_ready(pos_encoding_linear(x2, w2, b2))
    assert out2.shape == (4, 16, DIN2 + DOUT2), out2.shape
    assert jnp.allclose(out2, _reference(x2, w2, b2),
                        atol=1e-5, rtol=1e-5), "aligned-path mismatch"

    # 4) Fast MXU path (DEFAULT precision = single-pass bf16); loose tolerance
    #    vs the f32 reference bounds bf16 rounding error honestly.
    out_fast = jax.block_until_ready(
        pos_encoding_linear(x, w, b, precision=jax.lax.Precision.DEFAULT))
    assert jnp.allclose(out_fast, ref, atol=3e-2, rtol=3e-2), "fast-path mismatch"

    print("KERNEL_OK")
</pallas_src>

<mosaic_0001>
module attributes {stable_mosaic.version = 11 : i64} {
  func.func @_pos_encoding_linear_kernel(%arg0: i32, %arg1: memref<16x32xf32, #tpu.memory_space<vmem>>, %arg2: memref<32x96xf32, #tpu.memory_space<vmem>>, %arg3: memref<1x96xf32, #tpu.memory_space<vmem>>, %arg4: memref<16x128xf32, #tpu.memory_space<vmem>>) attributes {dimension_semantics = [#tpu.dimension_semantics<parallel>], iteration_bounds = array<i64: 1>, scalar_prefetch = 0 : i64, scratch_operands = 0 : i64, tpu.core_type = #tpu.core_type<tc>, window_params = [{transform_indices = @transform_0, window_bounds = array<i64: 16, 32>}, {pipeline_mode = #tpu.pipeline_mode<synchronous>, transform_indices = @transform_1, window_bounds = array<i64: 32, 96>}, {pipeline_mode = #tpu.pipeline_mode<synchronous>, transform_indices = @transform_2, window_bounds = array<i64: 1, 96>}, {transform_indices = @transform_3, window_bounds = array<i64: 16, 128>}]} {
    %c0 = arith.constant 0 : index
    %c0_0 = arith.constant 0 : index
    %0 = vector.load %arg1[%c0, %c0_0] : memref<16x32xf32, #tpu.memory_space<vmem>>, vector<16x32xf32>
    %c0_1 = arith.constant 0 : index
    %c0_2 = arith.constant 0 : index
    %1 = vector.load %arg2[%c0_1, %c0_2] : memref<32x96xf32, #tpu.memory_space<vmem>>, vector<32x96xf32>
    %cst = arith.constant dense<0.000000e+00> : vector<16x96xf32>
    %2 = tpu.matmul %0, %1, %cst {dimension_numbers = #tpu.dot_dimension_numbers<[1], [0], [0], [1], [0, 0, 1, 1], [], []>, precision = #tpu.contract_precision<fp32>} : vector<16x32xf32>, vector<32x96xf32>, vector<16x96xf32> -> vector<16x96xf32>
    %c0_3 = arith.constant 0 : index
    %c0_4 = arith.constant 0 : index
    %3 = vector.load %arg3[%c0_3, %c0_4] : memref<1x96xf32, #tpu.memory_space<vmem>>, vector<1x96xf32>
    %4 = vector.broadcast %3 : vector<1x96xf32> to vector<16x96xf32>
    %5 = arith.addf %2, %4 : vector<16x96xf32>
    %6 = tpu.concatenate %0, %5 in 1 : vector<16x32xf32>, vector<16x96xf32> -> vector<16x128xf32>
    %c0_5 = arith.constant 0 : index
    %c0_6 = arith.constant 0 : index
    %7 = vector.load %arg4[%c0_5, %c0_6] : memref<16x128xf32, #tpu.memory_space<vmem>>, vector<16x128xf32>
    tpu.vector_store %arg4[%c0_5, %c0_6], %6 {strides = array<i32>} : memref<16x128xf32, #tpu.memory_space<vmem>>, vector<16x128xf32>,
    return
  }
  func.func @transform_0(%arg0: i32) -> (i32, i32) {
    %c0_i32 = arith.constant 0 : i32
    %c0_i32_0 = arith.constant 0 : i32
    return %arg0, %c0_i32 : i32, i32
  }
  func.func @transform_1(%arg0: i32) -> (i32, i32) {
    %c0_i32 = arith.constant 0 : i32
    %c0_i32_0 = arith.constant 0 : i32
    %c0_i32_1 = arith.constant 0 : i32
    return %c0_i32, %c0_i32_0 : i32, i32
  }
  func.func @transform_2(%arg0: i32) -> (i32, i32) {
    %c0_i32 = arith.constant 0 : i32
    %c0_i32_0 = arith.constant 0 : i32
    %c0_i32_1 = arith.constant 0 : i32
    return %c0_i32, %c0_i32_0 : i32, i32
  }
  func.func @transform_3(%arg0: i32) -> (i32, i32) {
    %c0_i32 = arith.constant 0 : i32
    %c0_i32_0 = arith.constant 0 : i32
    return %arg0, %c0_i32 : i32, i32
  }
}

</mosaic_0001>

<llo_original>
// kernel: tpu_custom_call.1
$region0: #{tpu_custom_call.1}
  #allocation0 [shape = 'u32[]', space=smem, size = 0x4, offset = 0x4, fixed_abs, tag = 'smem constant byte address 0x4 - core index']
  #allocation1 [shape = 'u32[72,128]{1,0:T(1,128)}', space=vmem, size = 0x9000, scoped, tag = 'internal scratch']
  %s0 = inlined_call_operand.hbm [shape: f32[16,32], index: 0, kind: input, shape index: {}]
  %s1 = inlined_call_operand.hbm [shape: f32[32,96], index: 1, kind: input, shape index: {}]
  %s2 = inlined_call_operand.vmem [shape: f32[1,96], index: 2, kind: input, shape index: {}]
  %s3 = inlined_call_operand.hbm [shape: f32[16,128], index: 3, kind: output, shape index: {}]
  %s4 = sld [smem:[#allocation0]]
  $region30: #{tpu_custom_call.1} parent=0
    _
  %s6 = ssub.s32 1, %s4
  %s7 = scalar_select 0, %s6, %s4
  $region1: #{tpu_custom_call.1} parent=0
    #allocation2 [shape = 'u8[8192]{0}', space=vmem, size = 0x2000, scoped, tag = 'input window, operand 0, single buffered']
    #allocation3 [shape = 's32[1]{0}', space=sflag, size = 0x4, scoped, tag = 'scoped memory for tpu_custom_call.1']
    #allocation4 [shape = 's32[1]{0}', space=sflag, size = 0x4, scoped, tag = 'scoped memory for tpu_custom_call.1']
    #allocation5 [shape = 'u8[16384]{0}', space=vmem, size = 0x4000, scoped, tag = 'input window, operand 1, single buffered']
    #allocation6 [shape = 's32[1]{0}', space=sflag, size = 0x4, scoped, tag = 'scoped memory for tpu_custom_call.1']
    #allocation7 [shape = 'u8[8192]{0}', space=vmem, size = 0x2000, scoped, tag = 'output window, operand 0, single buffered']
    %8 = vsyncpa [#allocation3], 0
    %9 = vsyncpa [#allocation6], 0
    %10 = vsyncpa [#allocation4], 0
    // Predicated region
    $region2: #{tpu_custom_call.1} parent=1 // pred_check
      _
    $region3: #{tpu_custom_call.1} parent=1 // pred_check_branch
      %12 = sbr.rel (0) target = $region5
    $region4: #{tpu_custom_call.1} parent=1 // pred_region
      %14 = vsyncadd [#allocation3], 0
      %s15 = sshll.u32 %s0, 4
      %s16 = int_to_ptr.hbm [resolvable:$true] %s15
      %s17 = sshll.u32 [#allocation2], 4
      %s18 = int_to_ptr.vmem [resolvable:$true] %s17
      %23 = dma.hbm_to_vmem [thread:$0]  %s16, 256, %s18, [#allocation3], 128, 128, 8
    $region5: #{tpu_custom_call.1} parent=1 // pred_fallthru
      _
    // Predicated region
    $region6: #{tpu_custom_call.1} parent=1 // pred_check
      _
    $region7: #{tpu_custom_call.1} parent=1 // pred_check_branch
      %25 = sbr.rel (0) target = $region9
    $region8: #{tpu_custom_call.1} parent=1 // pred_region
      %27 = vsyncadd [#allocation6], 0
      %s28 = sshll.u32 %s1, 4
      %s29 = int_to_ptr.hbm [resolvable:$true] %s28
      %s30 = sshll.u32 [#allocation5], 4
      %s31 = int_to_ptr.vmem [resolvable:$true] %s30
      %36 = dma.hbm_to_vmem [thread:$0]  %s29, 512, %s31, [#allocation6], 128, 128, 8
    $region9: #{tpu_custom_call.1} parent=1 // pred_fallthru
      _
    // Predicated region
    $region10: #{tpu_custom_call.1} parent=1 // pred_check
      _
    $region11: #{tpu_custom_call.1} parent=1 // pred_check_branch
      %38 = sbr.rel (0) target = $region13
    $region12: #{tpu_custom_call.1} parent=1 // pred_region
      _
    $region13: #{tpu_custom_call.1} parent=1 // pred_fallthru
      _
    // Predicated region
    $region14: #{tpu_custom_call.1} parent=1 // pred_check
      _
    $region15: #{tpu_custom_call.1} parent=1 // pred_check_branch
      %40 = sbr.rel (0) target = $region17
    $region16: #{tpu_custom_call.1} parent=1 // pred_region
      %42 = dma.done [#allocation3], 256
    $region17: #{tpu_custom_call.1} parent=1 // pred_fallthru
      _
    // Predicated region
    $region18: #{tpu_custom_call.1} parent=1 // pred_check
      _
    $region19: #{tpu_custom_call.1} parent=1 // pred_check_branch
      %44 = sbr.rel (0) target = $region21
    $region20: #{tpu_custom_call.1} parent=1 // pred_region
      %46 = dma.done [#allocation6], 512
    $region21: #{tpu_custom_call.1} parent=1 // pred_fallthru
      _
    %v47 = vld [vmem:[#allocation2] sm:$0xff]
    %v48 = vld [vmem:[#allocation2 + $0x8] sm:$0xff]
    %v49 = vld [vmem:[#allocation5] sm:$0xff]
    %v50 = vld [vmem:[#allocation5 + $0x8] sm:$0xff]
    %v51 = vld [vmem:[#allocation5 + $0x10] sm:$0xff]
    %v52 = vld [vmem:[#allocation5 + $0x18] sm:$0xff]
    %v53 = vld [vmem:[%s2] sm:$0x1]
    %v55 = vperm.slane %v53, 0
    %vm57 = vcmask 261120
    %v59 = vsel %vm57, %v47, 0
    %v62 = vsel %vm57, %v48, 0
    %64 = vmatpush.msra.mxu0 0.0
    %65 = vmatpush.msra.mxu0 0.0
    %66 = vmatpush.msra.mxu0 0.0
    %67 = vmatpush.msra.mxu0 0.0
    %68 = vmatpush.msra.mxu0 0.0
    %69 = vmatpush.msra.mxu0 0.0
    %70 = vmatpush.msra.mxu0 0.0
    %71 = vmatpush.msra.mxu0 0.0
    %72 = vmatpush.msra.mxu0 0.0
    %73 = vmatpush.msra.mxu0 0.0
    %74 = vmatpush.msra.mxu0 0.0
    %75 = vmatpush.msra.mxu0 0.0
    %v76 = vand.u32 %v52, 4294901760
    %77 = vmatpush.msra.mxu0 %v76
    %v78 = vand.u32 %v51, 4294901760
    %79 = vmatpush.msra.mxu0 %v78
    %v80 = vand.u32 %v50, 4294901760
    %81 = vmatpush.msra.mxu0 %v80
    %v82 = vand.u32 %v49, 4294901760
    %83 = vmatpush.msra.mxu0 %v82
    %v84 = vand.u32 %v59, 4294901760
    %v85 = vsub.f32 %v59, %v84
    %v86 = vand.u32 %v85, 4294901760
    %v87 = vsub.f32 %v85, %v86
    %v88 = vand.u32 %v87, 4294901760
    %89 = vmatmul.f32.gmra.mxu0 %v88
    %v90 = vpop.f32.mrf.mxu0
    %v91 = vadd.f32 %v55, %v90
    %v92 = vand.u32 %v62, 4294901760
    %v93 = vsub.f32 %v62, %v92
    %v94 = vand.u32 %v93, 4294901760
    %v95 = vsub.f32 %v93, %v94
    %v96 = vand.u32 %v95, 4294901760
    %97 = vmatmul.f32.gmra.mxu0 %v96
    %v98 = vpop.f32.mrf.mxu0
    %v99 = vadd.f32 %v55, %v98
    %100 = vdwg.mxu0
    %101 = vmatpush.msra.mxu0 0.0
    %102 = vmatpush.msra.mxu0 0.0
    %103 = vmatpush.msra.mxu0 0.0
    %104 = vmatpush.msra.mxu0 0.0
    %105 = vmatpush.msra.mxu0 0.0
    %106 = vmatpush.msra.mxu0 0.0
    %107 = vmatpush.msra.mxu0 0.0
    %108 = vmatpush.msra.mxu0 0.0
    %109 = vmatpush.msra.mxu0 0.0
    %110 = vmatpush.msra.mxu0 0.0
    %111 = vmatpush.msra.mxu0 0.0
    %112 = vmatpush.msra.mxu0 0.0
    %v113 = vand.u32 %v52, 4294901760
    %v114 = vsub.f32 %v52, %v113
    %v115 = vand.u32 %v114, 4294901760
    %v116 = vsub.f32 %v114, %v115
    %v117 = vand.u32 %v116, 4294901760
    %118 = vmatpush.msra.mxu0 %v117
    %v119 = vand.u32 %v51, 4294901760
    %v120 = vsub.f32 %v51, %v119
    %v121 = vand.u32 %v120, 4294901760
    %v122 = vsub.f32 %v120, %v121
    %v123 = vand.u32 %v122, 4294901760
    %124 = vmatpush.msra.mxu0 %v123
    %v125 = vand.u32 %v50, 4294901760
    %v126 = vsub.f32 %v50, %v125
    %v127 = vand.u32 %v126, 4294901760
    %v128 = vsub.f32 %v126, %v127
    %v129 = vand.u32 %v128, 4294901760
    %130 = vmatpush.msra.mxu0 %v129
    %v131 = vand.u32 %v49, 4294901760
    %v132 = vsub.f32 %v49, %v131
    %v133 = vand.u32 %v132, 4294901760
    %v134 = vsub.f32 %v132, %v133
    %v135 = vand.u32 %v134, 4294901760
    %136 = vmatpush.msra.mxu0 %v135
    %v137 = vand.u32 %v59, 4294901760
    %138 = vmatmul.f32.gmra.mxu0 %v137
    %v139 = vpop.f32.mrf.mxu0
    %v140 = vadd.f32 %v91, %v139
    %v141 = vand.u32 %v62, 4294901760
    %142 = vmatmul.f32.gmra.mxu0 %v141
    %v143 = vpop.f32.mrf.mxu0
    %v144 = vadd.f32 %v99, %v143
    %145 = vdwg.mxu0
    %146 = vmatpush.msra.mxu0 0.0
    %147 = vmatpush.msra.mxu0 0.0
    %148 = vmatpush.msra.mxu0 0.0
    %149 = vmatpush.msra.mxu0 0.0
    %150 = vmatpush.msra.mxu0 0.0
    %151 = vmatpush.msra.mxu0 0.0
    %152 = vmatpush.msra.mxu0 0.0
    %153 = vmatpush.msra.mxu0 0.0
    %154 = vmatpush.msra.mxu0 0.0
    %155 = vmatpush.msra.mxu0 0.0
    %156 = vmatpush.msra.mxu0 0.0
    %157 = vmatpush.msra.mxu0 0.0
    %v158 = vand.u32 %v52, 4294901760
    %v159 = vsub.f32 %v52, %v158
    %160 = vmatpush.msra.mxu0 %v159
    %v161 = vand.u32 %v51, 4294901760
    %v162 = vsub.f32 %v51, %v161
    %163 = vmatpush.msra.mxu0 %v162
    %v164 = vand.u32 %v50, 4294901760
    %v165 = vsub.f32 %v50, %v164
    %166 = vmatpush.msra.mxu0 %v165
    %v167 = vand.u32 %v49, 4294901760
    %v168 = vsub.f32 %v49, %v167
    %169 = vmatpush.msra.mxu0 %v168
    %v170 = vand.u32 %v59, 4294901760
    %v171 = vsub.f32 %v59, %v170
    %172 = vmatmul.f32.gmra.mxu0 %v171
    %v173 = vpop.f32.mrf.mxu0
    %v174 = vadd.f32 %v140, %v173
    %v175 = vand.u32 %v62, 4294901760
    %v176 = vsub.f32 %v62, %v175
    %177 = vmatmul.f32.gmra.mxu0 %v176
    %v178 = vpop.f32.mrf.mxu0
    %v179 = vadd.f32 %v144, %v178
    %180 = vdwg.mxu0
    %181 = vmatpush.msra.mxu0 0.0
    %182 = vmatpush.msra.mxu0 0.0
    %183 = vmatpush.msra.mxu0 0.0
    %184 = vmatpush.msra.mxu0 0.0
    %185 = vmatpush.msra.mxu0 0.0
    %186 = vmatpush.msra.mxu0 0.0
    %187 = vmatpush.msra.mxu0 0.0
    %188 = vmatpush.msra.mxu0 0.0
    %189 = vmatpush.msra.mxu0 0.0
    %190 = vmatpush.msra.mxu0 0.0
    %191 = vmatpush.msra.mxu0 0.0
    %192 = vmatpush.msra.mxu0 0.0
    %v193 = vand.u32 %v52, 4294901760
    %194 = vmatpush.msra.mxu0 %v193
    %v195 = vand.u32 %v51, 4294901760
    %196 = vmatpush.msra.mxu0 %v195
    %v197 = vand.u32 %v50, 4294901760
    %198 = vmatpush.msra.mxu0 %v197
    %v199 = vand.u32 %v49, 4294901760
    %200 = vmatpush.msra.mxu0 %v199
    %v201 = vand.u32 %v59, 4294901760
    %v202 = vsub.f32 %v59, %v201
    %v203 = vand.u32 %v202, 4294901760
    %204 = vmatmul.f32.gmra.mxu0 %v203
    %v205 = vpop.f32.mrf.mxu0
    %v206 = vadd.f32 %v174, %v205
    %v207 = vand.u32 %v62, 4294901760
    %v208 = vsub.f32 %v62, %v207
    %v209 = vand.u32 %v208, 4294901760
    %210 = vmatmul.f32.gmra.mxu0 %v209
    %v211 = vpop.f32.mrf.mxu0
    %v212 = vadd.f32 %v179, %v211
    %213 = vdwg.mxu0
    %214 = vmatpush.msra.mxu0 0.0
    %215 = vmatpush.msra.mxu0 0.0
    %216 = vmatpush.msra.mxu0 0.0
    %217 = vmatpush.msra.mxu0 0.0
    %218 = vmatpush.msra.mxu0 0.0
    %219 = vmatpush.msra.mxu0 0.0
    %220 = vmatpush.msra.mxu0 0.0
    %221 = vmatpush.msra.mxu0 0.0
    %222 = vmatpush.msra.mxu0 0.0
    %223 = vmatpush.msra.mxu0 0.0
    %224 = vmatpush.msra.mxu0 0.0
    %225 = vmatpush.msra.mxu0 0.0
    %v226 = vand.u32 %v52, 4294901760
    %v227 = vsub.f32 %v52, %v226
    %v228 = vand.u32 %v227, 4294901760
    %229 = vmatpush.msra.mxu0 %v228
    %v230 = vand.u32 %v51, 4294901760
    %v231 = vsub.f32 %v51, %v230
    %v232 = vand.u32 %v231, 4294901760
    %233 = vmatpush.msra.mxu0 %v232
    %v234 = vand.u32 %v50, 4294901760
    %v235 = vsub.f32 %v50, %v234
    %v236 = vand.u32 %v235, 4294901760
    %237 = vmatpush.msra.mxu0 %v236
    %v238 = vand.u32 %v49, 4294901760
    %v239 = vsub.f32 %v49, %v238
    %v240 = vand.u32 %v239, 4294901760
    %241 = vmatpush.msra.mxu0 %v240
    %v242 = vand.u32 %v59, 4294901760
    %243 = vmatmul.f32.gmra.mxu0 %v242
    %v244 = vpop.f32.mrf.mxu0
    %v245 = vadd.f32 %v206, %v244
    %v246 = vand.u32 %v62, 4294901760
    %247 = vmatmul.f32.gmra.mxu0 %v246
    %v248 = vpop.f32.mrf.mxu0
    %v249 = vadd.f32 %v212, %v248
    %250 = vdwg.mxu0
    %251 = vmatpush.msra.mxu0 0.0
    %252 = vmatpush.msra.mxu0 0.0
    %253 = vmatpush.msra.mxu0 0.0
    %254 = vmatpush.msra.mxu0 0.0
    %255 = vmatpush.msra.mxu0 0.0
    %256 = vmatpush.msra.mxu0 0.0
    %257 = vmatpush.msra.mxu0 0.0
    %258 = vmatpush.msra.mxu0 0.0
    %259 = vmatpush.msra.mxu0 0.0
    %260 = vmatpush.msra.mxu0 0.0
    %261 = vmatpush.msra.mxu0 0.0
    %262 = vmatpush.msra.mxu0 0.0
    %v263 = vand.u32 %v52, 4294901760
    %264 = vmatpush.msra.mxu0 %v263
    %v265 = vand.u32 %v51, 4294901760
    %266 = vmatpush.msra.mxu0 %v265
    %v267 = vand.u32 %v50, 4294901760
    %268 = vmatpush.msra.mxu0 %v267
    %v269 = vand.u32 %v49, 4294901760
    %270 = vmatpush.msra.mxu0 %v269
    %v271 = vand.u32 %v59, 4294901760
    %272 = vmatmul.f32.gmra.mxu0 %v271
    %v273 = vpop.f32.mrf.mxu0
    %v274 = vadd.f32 %v245, %v273
    %v275 = vand.u32 %v62, 4294901760
    %276 = vmatmul.f32.gmra.mxu0 %v275
    %v277 = vpop.f32.mrf.mxu0
    %v278 = vadd.f32 %v249, %v277
    %279 = vdwg.mxu0
    %282 = vrot.lane.b32.xlu0 %v274, 32
    %v283 = vpop.permute.xlu0 %282
    %284 = vrot.lane.b32.xlu0 %v278, 32
    %v285 = vpop.permute.xlu0 %284
    %v288 = vsel %vm57, %v47, %v283
    %v289 = vsel %vm57, %v48, %v285
    %290 = vst [vmem:[#allocation7] sm:$0xff] %v288
    %291 = vst [vmem:[#allocation7 + $0x8] sm:$0xff] %v289
    // Predicated region
    $region22: #{tpu_custom_call.1} parent=1 // pred_check
      _
    $region23: #{tpu_custom_call.1} parent=1 // pred_check_branch
      %293 = sbr.rel (0) target = $region25
    $region24: #{tpu_custom_call.1} parent=1 // pred_region
      %295 = vsyncadd [#allocation4], 0
      %s296 = sshll.u32 [#allocation7], 4
      %s297 = int_to_ptr.vmem [resolvable:$true] %s296
      %s298 = sshll.u32 %s3, 4
      %s299 = int_to_ptr.hbm [resolvable:$true] %s298
      %304 = dma.vmem_to_hbm [thread:$0]  %s297, 256, %s299, [#allocation4], 128, 128, 8
    $region25: #{tpu_custom_call.1} parent=1 // pred_fallthru
      _
    // Predicated region
    $region26: #{tpu_custom_call.1} parent=1 // pred_check
      _
    $region27: #{tpu_custom_call.1} parent=1 // pred_check_branch
      %306 = sbr.rel (0) target = $region29
    $region28: #{tpu_custom_call.1} parent=1 // pred_region
      %308 = dma.done [#allocation4], 256
    $region29: #{tpu_custom_call.1} parent=1 // pred_fallthru
      _
    %309 = vsyncpa [#allocation3], 1
    %310 = vsyncpa [#allocation6], 1
    %311 = vsyncpa [#allocation4], 1

</llo_original>
